<compile_context>
chip_gen: v6e
topology: v6e:2x2x1
jax: 0.10.0
libtpu: 0.0.40
codegen_flags: <defaults>
</compile_context>

<pallas_src>
import functools

import jax
import jax.numpy as jnp
from jax import lax
from jax.experimental import pallas as pl
from jax.experimental.pallas import tpu as pltpu


def _headp_kernel(x_ref, w1_ref, b1_ref, w2_ref, b2_ref, o_ref, *, H, W):
    """One batch element per grid step.

    x_ref  : (1, Cpad, H*W + 2*(W+1)) f32  -- channels-on-sublanes, flattened
             spatial on lanes, with a zero halo of W+1 lanes on each side.
    w1_ref : (MID, 9*Cpad)            bf16 -- BN-folded 3x3 conv weights,
             ordered (kh, kw, c).
    b1_ref : (MID, 1)                 f32  -- BN-folded conv1 bias.
    w2_ref : (DP, MID)                bf16 -- 1x1 conv weights.
    b2_ref : (DP, 1)                  f32  -- conv2 bias.
    o_ref  : (1, DP, H*W)             f32  -- lane-dense output (NCHW layout).
    """
    HW = H * W
    halo = W + 1
    xe = x_ref[0]                                        # (Cpad, HW + 2*halo)

    # Column index of each flattened spatial position (for the left/right
    # border masks of the shifted taps).
    col = lax.broadcasted_iota(jnp.int32, (1, HW), 1) % W

    views = []
    for dh in (-1, 0, 1):
        for dw in (-1, 0, 1):
            s = halo + dh * W + dw                       # static lane offset
            v = xe[:, s:s + HW]                          # x[hw + dh*W + dw], 0-filled
            # Top/bottom halo is already zero via the pad; mask positions
            # where the flat shift wrapped across the image's left/right edge.
            if dw == 1:
                v = jnp.where(col < W - 1, v, 0.0)
            elif dw == -1:
                v = jnp.where(col >= 1, v, 0.0)
            views.append(v)

    # im2col patch: (9*Cpad, HW); one bf16 MXU matmul with K = 9*Cpad.
    patch = jnp.concatenate(views, axis=0).astype(jnp.bfloat16)

    h = jnp.dot(w1_ref[...], patch,
                preferred_element_type=jnp.float32)      # (MID, HW) f32
    h = jnp.maximum(h + b1_ref[...], 0.0)                # folded BN bias + ReLU
    out = jnp.dot(w2_ref[...], h.astype(jnp.bfloat16),
                  preferred_element_type=jnp.float32)    # (DP, HW) f32
    o_ref[...] = (out + b2_ref[...])[None]


def headp_forward(x_nchw, params, eps=1e-5):
    """x_nchw: [N, Cin, H, W] float32. Returns [N, Dp, H, W] float32."""
    N, CIN, H, W = x_nchw.shape
    HW = H * W
    halo = W + 1
    CIN_PAD = ((CIN + 7) // 8) * 8                       # sublane-align channels

    w1, b1 = params["w1"], params["b1"]                  # (MID,CIN,3,3), (MID,)
    gamma, beta = params["gamma"], params["beta"]
    mean, var = params["running_mean"], params["running_var"]
    w2, b2 = params["w2"], params["b2"]                  # (DP,MID), (DP,)
    MID, DP = w1.shape[0], w2.shape[0]

    # ---- parameter folding (wrapper-side, done once) ----------------------
    scale = gamma / jnp.sqrt(var + eps)                  # eval-mode BN
    w1_fold = w1 * scale[:, None, None, None]
    b1_fold = b1 * scale + (beta - mean * scale)
    w1_khkwc = jnp.transpose(w1_fold, (0, 2, 3, 1))      # (MID, 3, 3, CIN)
    w1_khkwc = jnp.pad(w1_khkwc, ((0, 0), (0, 0), (0, 0), (0, CIN_PAD - CIN)))
    w1_mat = w1_khkwc.reshape(MID, 9 * CIN_PAD).astype(jnp.bfloat16)
    w2_mat = w2.astype(jnp.bfloat16)
    b1_col = b1_fold.reshape(MID, 1).astype(jnp.float32)
    b2_col = b2.reshape(DP, 1).astype(jnp.float32)

    # ---- input: free reshape + one tiny pad (halo + channel alignment) ----
    x_flat = x_nchw.reshape(N, CIN, HW).astype(jnp.float32)
    x_ext = jnp.pad(x_flat, ((0, 0), (0, CIN_PAD - CIN), (halo, halo)))
    EXT = HW + 2 * halo

    kernel = functools.partial(_headp_kernel, H=H, W=W)
    out_flat = pl.pallas_call(
        kernel,
        out_shape=jax.ShapeDtypeStruct((N, DP, HW), jnp.float32),
        grid_spec=pltpu.PrefetchScalarGridSpec(
            num_scalar_prefetch=0,
            grid=(N,),
            in_specs=[
                pl.BlockSpec((1, CIN_PAD, EXT), lambda n: (n, 0, 0)),
                pl.BlockSpec((MID, 9 * CIN_PAD), lambda n: (0, 0)),
                pl.BlockSpec((MID, 1), lambda n: (0, 0)),
                pl.BlockSpec((DP, MID), lambda n: (0, 0)),
                pl.BlockSpec((DP, 1), lambda n: (0, 0)),
            ],
            out_specs=pl.BlockSpec((1, DP, HW), lambda n: (n, 0, 0)),
        ),
        compiler_params=pltpu.CompilerParams(
            dimension_semantics=("parallel",)),
    )(x_ext, w1_mat, b1_col, w2_mat, b2_col)

    # (N, DP, H*W) is already NCHW-flattened -> free reshape, no transpose.
    return out_flat.reshape(N, DP, H, W)


def headp_reference(x, params, eps=1e-5):
    """Pure-JAX reference matching the PyTorch HeadP (eval mode)."""
    w1, b1 = params["w1"], params["b1"]
    gamma, beta = params["gamma"], params["beta"]
    mean, var = params["running_mean"], params["running_var"]
    w2, b2 = params["w2"], params["b2"]
    z = lax.conv_general_dilated(
        x, w1, window_strides=(1, 1), padding=((1, 1), (1, 1)),
        dimension_numbers=("NCHW", "OIHW", "NCHW"))
    z = z + b1[None, :, None, None]
    z = (z - mean[None, :, None, None]) \
        * (gamma / jnp.sqrt(var + eps))[None, :, None, None] \
        + beta[None, :, None, None]
    z = jnp.maximum(z, 0.0)
    return jnp.einsum("nchw,dc->ndhw", z, w2) + b2[None, :, None, None]


def init_params(key, in_ch, mid_ch, dp):
    ks = jax.random.split(key, 8)
    # conv1: Conv2d(in_ch, mid, 3, padding=1) -> OIHW weights (PyTorch layout).
    w1 = 0.1 * jax.random.normal(ks[0], (mid_ch, in_ch, 3, 3), jnp.float32)
    b1 = 0.1 * jax.random.normal(ks[1], (mid_ch,), jnp.float32)
    # BatchNorm2d(mid) parameters / running stats (eval mode).
    gamma = 1.0 + 0.1 * jax.random.normal(ks[2], (mid_ch,), jnp.float32)
    beta = 0.1 * jax.random.normal(ks[3], (mid_ch,), jnp.float32)
    r_mean = 0.1 * jax.random.normal(ks[4], (mid_ch,), jnp.float32)
    r_var = jax.random.uniform(ks[5], (mid_ch,), jnp.float32, 0.5, 1.5)
    # conv2: Conv2d(mid, Dp, 1) -> (Dp, mid) matmul weights.
    w2 = 0.1 * jax.random.normal(ks[6], (dp, mid_ch), jnp.float32)
    b2 = 0.1 * jax.random.normal(ks[7], (dp,), jnp.float32)
    return dict(w1=w1, b1=b1, gamma=gamma, beta=beta,
                running_mean=r_mean, running_var=r_var, w2=w2, b2=b2)


if __name__ == "__main__":
    key = jax.random.PRNGKey(0)
    k_x, k_p = jax.random.split(key)

    N, IN_CH, H, W = 2, 4, 16, 16
    MID = IN_CH        # mid_ch=None -> mid = in_ch
    DP = 2

    x = jax.random.normal(k_x, (N, IN_CH, H, W), jnp.float32)
    params = init_params(k_p, IN_CH, MID, DP)

    out = jax.block_until_ready(jax.jit(headp_forward)(x, params))
    assert out.shape == (N, DP, H, W), out.shape

    ref = headp_reference(x, params)
    max_err = float(jnp.max(jnp.abs(out - ref)))
    assert max_err < 5e-2, f"max abs error vs reference: {max_err}"
    print("KERNEL_OK")
</pallas_src>

<mosaic_0001>
module attributes {stable_mosaic.version = 11 : i64} {
  func.func @_headp_kernel(%arg0: i32, %arg1: memref<1x8x290xf32, #tpu.memory_space<vmem>>, %arg2: memref<4x72xbf16, #tpu.memory_space<vmem>>, %arg3: memref<4x1xf32, #tpu.memory_space<vmem>>, %arg4: memref<2x4xbf16, #tpu.memory_space<vmem>>, %arg5: memref<2x1xf32, #tpu.memory_space<vmem>>, %arg6: memref<1x2x256xf32, #tpu.memory_space<vmem>>) attributes {dimension_semantics = [#tpu.dimension_semantics<parallel>], iteration_bounds = array<i64: 2>, scalar_prefetch = 0 : i64, scratch_operands = 0 : i64, tpu.core_type = #tpu.core_type<tc>, window_params = [{transform_indices = @transform_0, window_bounds = array<i64: 1, 8, 290>}, {pipeline_mode = #tpu.pipeline_mode<synchronous>, transform_indices = @transform_1, window_bounds = array<i64: 4, 72>}, {pipeline_mode = #tpu.pipeline_mode<synchronous>, transform_indices = @transform_2, window_bounds = array<i64: 4, 1>}, {pipeline_mode = #tpu.pipeline_mode<synchronous>, transform_indices = @transform_3, window_bounds = array<i64: 2, 4>}, {pipeline_mode = #tpu.pipeline_mode<synchronous>, transform_indices = @transform_4, window_bounds = array<i64: 2, 1>}, {transform_indices = @transform_5, window_bounds = array<i64: 1, 2, 256>}]} {
    %c0 = arith.constant 0 : index
    %c0_0 = arith.constant 0 : index
    %c0_1 = arith.constant 0 : index
    %0 = vector.load %arg1[%c0, %c0_0, %c0_1] : memref<1x8x290xf32, #tpu.memory_space<vmem>>, vector<1x8x290xf32>
    %1 = vector.shape_cast %0 : vector<1x8x290xf32> to vector<8x290xf32>
    %2 = tpu.iota {dimensions = array<i32: 1>} : vector<1x256xi32>
    %c16_i32 = arith.constant 16 : i32
    %c0_i32 = arith.constant 0 : i32
    %3 = arith.cmpi eq, %c16_i32, %c0_i32 : i32
    %c1_i32 = arith.constant 1 : i32
    %4 = arith.select %3, %c1_i32, %c16_i32 : i32
    %5 = vector.broadcast %4 : i32 to vector<1x256xi32>
    %6 = arith.remsi %2, %5 : vector<1x256xi32>
    %c0_i32_2 = arith.constant 0 : i32
    %7 = vector.broadcast %c0_i32_2 : i32 to vector<1x256xi32>
    %8 = arith.cmpi ne, %6, %7 : vector<1x256xi32>
    %c0_i32_3 = arith.constant 0 : i32
    %9 = vector.broadcast %c0_i32_3 : i32 to vector<1x256xi32>
    %10 = arith.cmpi slt, %6, %9 : vector<1x256xi32>
    %c0_i32_4 = arith.constant 0 : i32
    %11 = arith.cmpi slt, %4, %c0_i32_4 : i32
    %12 = vector.broadcast %11 : i1 to vector<1x256xi1>
    %13 = vector.broadcast %12 : vector<1x256xi1> to vector<1x256xi1>
    %14 = arith.xori %10, %13 : vector<1x256xi1>
    %15 = arith.andi %14, %8 : vector<1x256xi1>
    %16 = vector.broadcast %4 : i32 to vector<1x256xi32>
    %17 = arith.addi %6, %16 : vector<1x256xi32>
    %18 = arith.select %15, %17, %6 : vector<1x256xi1>, vector<1x256xi32>
    %19 = vector.extract_strided_slice %1 {offsets = [0, 0], sizes = [8, 256], strides = [1, 1]} : vector<8x290xf32> to vector<8x256xf32>
    %c1_i32_5 = arith.constant 1 : i32
    %20 = vector.broadcast %c1_i32_5 : i32 to vector<1x256xi32>
    %21 = arith.cmpi sge, %18, %20 : vector<1x256xi32>
    %cst = arith.constant 0.000000e+00 : f32
    %22 = vector.shape_cast %21 : vector<1x256xi1> to vector<1x256xi1>
    %23 = vector.broadcast %22 : vector<1x256xi1> to vector<8x256xi1>
    %24 = vector.broadcast %cst : f32 to vector<8x256xf32>
    %25 = arith.select %23, %19, %24 : vector<8x256xi1>, vector<8x256xf32>
    %26 = vector.extract_strided_slice %1 {offsets = [0, 1], sizes = [8, 256], strides = [1, 1]} : vector<8x290xf32> to vector<8x256xf32>
    %27 = vector.extract_strided_slice %1 {offsets = [0, 2], sizes = [8, 256], strides = [1, 1]} : vector<8x290xf32> to vector<8x256xf32>
    %c15_i32 = arith.constant 15 : i32
    %28 = vector.broadcast %c15_i32 : i32 to vector<1x256xi32>
    %29 = arith.cmpi slt, %18, %28 : vector<1x256xi32>
    %cst_6 = arith.constant 0.000000e+00 : f32
    %30 = vector.shape_cast %29 : vector<1x256xi1> to vector<1x256xi1>
    %31 = vector.broadcast %30 : vector<1x256xi1> to vector<8x256xi1>
    %32 = vector.broadcast %cst_6 : f32 to vector<8x256xf32>
    %33 = arith.select %31, %27, %32 : vector<8x256xi1>, vector<8x256xf32>
    %34 = vector.extract_strided_slice %1 {offsets = [0, 16], sizes = [8, 256], strides = [1, 1]} : vector<8x290xf32> to vector<8x256xf32>
    %c1_i32_7 = arith.constant 1 : i32
    %35 = vector.broadcast %c1_i32_7 : i32 to vector<1x256xi32>
    %36 = arith.cmpi sge, %18, %35 : vector<1x256xi32>
    %cst_8 = arith.constant 0.000000e+00 : f32
    %37 = vector.shape_cast %36 : vector<1x256xi1> to vector<1x256xi1>
    %38 = vector.broadcast %37 : vector<1x256xi1> to vector<8x256xi1>
    %39 = vector.broadcast %cst_8 : f32 to vector<8x256xf32>
    %40 = arith.select %38, %34, %39 : vector<8x256xi1>, vector<8x256xf32>
    %41 = vector.extract_strided_slice %1 {offsets = [0, 17], sizes = [8, 256], strides = [1, 1]} : vector<8x290xf32> to vector<8x256xf32>
    %42 = vector.extract_strided_slice %1 {offsets = [0, 18], sizes = [8, 256], strides = [1, 1]} : vector<8x290xf32> to vector<8x256xf32>
    %c15_i32_9 = arith.constant 15 : i32
    %43 = vector.broadcast %c15_i32_9 : i32 to vector<1x256xi32>
    %44 = arith.cmpi slt, %18, %43 : vector<1x256xi32>
    %cst_10 = arith.constant 0.000000e+00 : f32
    %45 = vector.shape_cast %44 : vector<1x256xi1> to vector<1x256xi1>
    %46 = vector.broadcast %45 : vector<1x256xi1> to vector<8x256xi1>
    %47 = vector.broadcast %cst_10 : f32 to vector<8x256xf32>
    %48 = arith.select %46, %42, %47 : vector<8x256xi1>, vector<8x256xf32>
    %49 = vector.extract_strided_slice %1 {offsets = [0, 32], sizes = [8, 256], strides = [1, 1]} : vector<8x290xf32> to vector<8x256xf32>
    %c1_i32_11 = arith.constant 1 : i32
    %50 = vector.broadcast %c1_i32_11 : i32 to vector<1x256xi32>
    %51 = arith.cmpi sge, %18, %50 : vector<1x256xi32>
    %cst_12 = arith.constant 0.000000e+00 : f32
    %52 = vector.shape_cast %51 : vector<1x256xi1> to vector<1x256xi1>
    %53 = vector.broadcast %52 : vector<1x256xi1> to vector<8x256xi1>
    %54 = vector.broadcast %cst_12 : f32 to vector<8x256xf32>
    %55 = arith.select %53, %49, %54 : vector<8x256xi1>, vector<8x256xf32>
    %56 = vector.extract_strided_slice %1 {offsets = [0, 33], sizes = [8, 256], strides = [1, 1]} : vector<8x290xf32> to vector<8x256xf32>
    %57 = vector.extract_strided_slice %1 {offsets = [0, 34], sizes = [8, 256], strides = [1, 1]} : vector<8x290xf32> to vector<8x256xf32>
    %c15_i32_13 = arith.constant 15 : i32
    %58 = vector.broadcast %c15_i32_13 : i32 to vector<1x256xi32>
    %59 = arith.cmpi slt, %18, %58 : vector<1x256xi32>
    %cst_14 = arith.constant 0.000000e+00 : f32
    %60 = vector.shape_cast %59 : vector<1x256xi1> to vector<1x256xi1>
    %61 = vector.broadcast %60 : vector<1x256xi1> to vector<8x256xi1>
    %62 = vector.broadcast %cst_14 : f32 to vector<8x256xf32>
    %63 = arith.select %61, %57, %62 : vector<8x256xi1>, vector<8x256xf32>
    %64 = tpu.concatenate %25, %26, %33, %40, %41, %48, %55, %56, %63 in 0 : vector<8x256xf32>, vector<8x256xf32>, vector<8x256xf32>, vector<8x256xf32>, vector<8x256xf32>, vector<8x256xf32>, vector<8x256xf32>, vector<8x256xf32>, vector<8x256xf32> -> vector<72x256xf32>
    %65 = arith.truncf %64 : vector<72x256xf32> to vector<72x256xbf16>
    %c0_15 = arith.constant 0 : index
    %c0_16 = arith.constant 0 : index
    %66 = vector.load %arg2[%c0_15, %c0_16] : memref<4x72xbf16, #tpu.memory_space<vmem>>, vector<4x72xbf16>
    %cst_17 = arith.constant dense<0.000000e+00> : vector<4x256xf32>
    %67 = tpu.matmul %66, %65, %cst_17 {dimension_numbers = #tpu.dot_dimension_numbers<[1], [0], [0], [1], [0, 0, 1, 1], [], []>} : vector<4x72xbf16>, vector<72x256xbf16>, vector<4x256xf32> -> vector<4x256xf32>
    %c0_18 = arith.constant 0 : index
    %c0_19 = arith.constant 0 : index
    %68 = vector.load %arg3[%c0_18, %c0_19] : memref<4x1xf32, #tpu.memory_space<vmem>>, vector<4x1xf32>
    %69 = vector.broadcast %68 : vector<4x1xf32> to vector<4x256xf32>
    %70 = arith.addf %67, %69 : vector<4x256xf32>
    %cst_20 = arith.constant 0.000000e+00 : f32
    %71 = vector.broadcast %cst_20 : f32 to vector<4x256xf32>
    %72 = arith.maximumf %70, %71 : vector<4x256xf32>
    %c0_21 = arith.constant 0 : index
    %c0_22 = arith.constant 0 : index
    %73 = vector.load %arg4[%c0_21, %c0_22] : memref<2x4xbf16, #tpu.memory_space<vmem>>, vector<2x4xbf16>
    %74 = arith.truncf %72 : vector<4x256xf32> to vector<4x256xbf16>
    %cst_23 = arith.constant dense<0.000000e+00> : vector<2x256xf32>
    %75 = tpu.matmul %73, %74, %cst_23 {dimension_numbers = #tpu.dot_dimension_numbers<[1], [0], [0], [1], [0, 0, 1, 1], [], []>} : vector<2x4xbf16>, vector<4x256xbf16>, vector<2x256xf32> -> vector<2x256xf32>
    %c0_24 = arith.constant 0 : index
    %c0_25 = arith.constant 0 : index
    %76 = vector.load %arg5[%c0_24, %c0_25] : memref<2x1xf32, #tpu.memory_space<vmem>>, vector<2x1xf32>
    %77 = vector.broadcast %76 : vector<2x1xf32> to vector<2x256xf32>
    %78 = arith.addf %75, %77 : vector<2x256xf32>
    %79 = vector.shape_cast %78 : vector<2x256xf32> to vector<1x2x256xf32>
    %c0_26 = arith.constant 0 : index
    %c0_27 = arith.constant 0 : index
    %c0_28 = arith.constant 0 : index
    %80 = vector.load %arg6[%c0_26, %c0_27, %c0_28] : memref<1x2x256xf32, #tpu.memory_space<vmem>>, vector<1x2x256xf32>
    tpu.vector_store %arg6[%c0_26, %c0_27, %c0_28], %79 {strides = array<i32>} : memref<1x2x256xf32, #tpu.memory_space<vmem>>, vector<1x2x256xf32>,
    return
  }
  func.func @transform_0(%arg0: i32) -> (i32, i32, i32) {
    %c0_i32 = arith.constant 0 : i32
    %c0_i32_0 = arith.constant 0 : i32
    %c0_i32_1 = arith.constant 0 : i32
    return %arg0, %c0_i32, %c0_i32_0 : i32, i32, i32
  }
  func.func @transform_1(%arg0: i32) -> (i32, i32) {
    %c0_i32 = arith.constant 0 : i32
    %c0_i32_0 = arith.constant 0 : i32
    %c0_i32_1 = arith.constant 0 : i32
    return %c0_i32, %c0_i32_0 : i32, i32
  }
  func.func @transform_2(%arg0: i32) -> (i32, i32) {
    %c0_i32 = arith.constant 0 : i32
    %c0_i32_0 = arith.constant 0 : i32
    %c0_i32_1 = arith.constant 0 : i32
    return %c0_i32, %c0_i32_0 : i32, i32
  }
  func.func @transform_3(%arg0: i32) -> (i32, i32) {
    %c0_i32 = arith.constant 0 : i32
    %c0_i32_0 = arith.constant 0 : i32
    %c0_i32_1 = arith.constant 0 : i32
    return %c0_i32, %c0_i32_0 : i32, i32
  }
  func.func @transform_4(%arg0: i32) -> (i32, i32) {
    %c0_i32 = arith.constant 0 : i32
    %c0_i32_0 = arith.constant 0 : i32
    %c0_i32_1 = arith.constant 0 : i32
    return %c0_i32, %c0_i32_0 : i32, i32
  }
  func.func @transform_5(%arg0: i32) -> (i32, i32, i32) {
    %c0_i32 = arith.constant 0 : i32
    %c0_i32_0 = arith.constant 0 : i32
    %c0_i32_1 = arith.constant 0 : i32
    return %arg0, %c0_i32, %c0_i32_0 : i32, i32, i32
  }
}

</mosaic_0001>

<llo_original>
// kernel: headp_forward.1
$region0: #{headp_forward.1}
  #allocation0 [shape = 'u32[]', space=smem, size = 0x4, offset = 0x4, fixed_abs, tag = 'smem constant byte address 0x4 - core index']
  #allocation1 [shape = 'u32[144,128]{1,0:T(1,128)}', space=vmem, size = 0x12000, scoped, tag = 'internal scratch']
  %s0 = inlined_call_operand.vmem [shape: f32[2,8,290], index: 0, kind: input, shape index: {}]
  %s1 = inlined_call_operand.vmem [shape: bf16[4,72], index: 1, kind: input, shape index: {}]
  %s2 = inlined_call_operand.vmem [shape: f32[4,1], index: 2, kind: input, shape index: {}]
  %s3 = inlined_call_operand.vmem [shape: bf16[2,4], index: 3, kind: input, shape index: {}]
  %s4 = inlined_call_operand.vmem [shape: f32[2,1], index: 4, kind: input, shape index: {}]
  %s5 = inlined_call_operand.vmem [shape: f32[2,2,256], index: 5, kind: output, shape index: {}]
  %s6 = sld [smem:[#allocation0]]
  $region53: #{headp_forward.1} parent=0
    _
  %s8 = ssub.s32 1, %s6
  %s9 = scalar_select 0, %s8, %s6
  loop: start=0, step=1, limit=4
  $region2: #{headp_forward.1} parent=0 // loop_pre_header
    _
  $region3: #{headp_forward.1} parent=0 // loop_header
    %s11 = sphi 0, %s15
    %p12 = scmp.ge.s32.totalorder %s11, 4
    %s21 = sphi 0, %s23
    %s24 = sphi 0, %s21
    %s25 = sphi 0, %s24
    %s41 = sphi 0, %s25
    %s45 = sphi 0, %s45
    %s47 = sphi 0, %s45
    %s48 = sphi 0, %s47
    %s62 = sphi 0, %s48
    %s66 = sphi 0, %s66
    %s68 = sphi 0, %s66
    %s69 = sphi 0, %s68
    %s83 = sphi 0, %s69
    %s87 = sphi 0, %s87
    %s89 = sphi 0, %s87
    %s90 = sphi 0, %s89
    %s104 = sphi 0, %s90
    %s108 = sphi 0, %s108
    %s110 = sphi 0, %s108
    %s111 = sphi 0, %s110
    %s125 = sphi 0, %s111
    %s131 = sphi 0, %s133
    %s134 = sphi 0, %s131
    %s135 = sphi 0, %s134
    %s151 = sphi 0, %s135
  $region4: #{headp_forward.1} parent=0 // loop_header_branch
    %14 = sbr.rel (%p12) target = $region8
  $region5: #{headp_forward.1} parent=0 // loop_body
    %s16 = ssub.s32 %s11, 1
    %s17 = ssub.s32 %s11, 2
    %s18 = sadd.s32 %s11, 1
    %s19 = ssub.s32 %s11, %s18
    %p20 = scmp.eq.s32.totalorder %s19, 0
    %s22 = sadd.s32 %s21, 1
    %s23 = scalar_select %p20, %s21, %s22
    %p26 = pneg %p20
    %p27 = scmp.eq.s32.totalorder %s11, 1
    %p28 = por %p26, %p27
    %p29 = scmp.ne.s32.totalorder %s21, %s24
    %p30 = scmp.eq.s32.totalorder %s11, 0
    %p31 = por %p29, %p30
    %p32 = scmp.ne.s32.totalorder %s21, %s24
    %p33 = scmp.eq.s32.totalorder %s16, 1
    %p34 = por %p32, %p33
    %p35 = scmp.ne.s32.totalorder %s24, %s25
    %p36 = scmp.eq.s32.totalorder %s16, 0
    %p37 = por %p35, %p36
    %p38 = scmp.ne.s32.totalorder %s24, %s25
    %p39 = scmp.eq.s32.totalorder %s17, 1
    %p40 = por %p38, %p39
    %p42 = scmp.ne.s32.totalorder %s25, %s41
    %p43 = scmp.eq.s32.totalorder %s17, 0
    %p44 = por %p42, %p43
    %s46 = sadd.s32 %s45, 1
    %p49 = scmp.eq.s32.totalorder %s11, 1
    %p50 = scmp.ne.s32.totalorder %s45, %s47
    %p51 = scmp.eq.s32.totalorder %s11, 0
    %p52 = por %p50, %p51
    %p53 = scmp.ne.s32.totalorder %s45, %s47
    %p54 = scmp.eq.s32.totalorder %s16, 1
    %p55 = por %p53, %p54
    %p56 = scmp.ne.s32.totalorder %s47, %s48
    %p57 = scmp.eq.s32.totalorder %s16, 0
    %p58 = por %p56, %p57
    %p59 = scmp.ne.s32.totalorder %s47, %s48
    %p60 = scmp.eq.s32.totalorder %s17, 1
    %p61 = por %p59, %p60
    %p63 = scmp.ne.s32.totalorder %s48, %s62
    %p64 = scmp.eq.s32.totalorder %s17, 0
    %p65 = por %p63, %p64
    %s67 = sadd.s32 %s66, 1
    %p70 = scmp.eq.s32.totalorder %s11, 1
    %p71 = scmp.ne.s32.totalorder %s66, %s68
    %p72 = scmp.eq.s32.totalorder %s11, 0
    %p73 = por %p71, %p72
    %p74 = scmp.ne.s32.totalorder %s66, %s68
    %p75 = scmp.eq.s32.totalorder %s16, 1
    %p76 = por %p74, %p75
    %p77 = scmp.ne.s32.totalorder %s68, %s69
    %p78 = scmp.eq.s32.totalorder %s16, 0
    %p79 = por %p77, %p78
    %p80 = scmp.ne.s32.totalorder %s68, %s69
    %p81 = scmp.eq.s32.totalorder %s17, 1
    %p82 = por %p80, %p81
    %p84 = scmp.ne.s32.totalorder %s69, %s83
    %p85 = scmp.eq.s32.totalorder %s17, 0
    %p86 = por %p84, %p85
    %s88 = sadd.s32 %s87, 1
    %p91 = scmp.eq.s32.totalorder %s11, 1
    %p92 = scmp.ne.s32.totalorder %s87, %s89
    %p93 = scmp.eq.s32.totalorder %s11, 0
    %p94 = por %p92, %p93
    %p95 = scmp.ne.s32.totalorder %s87, %s89
    %p96 = scmp.eq.s32.totalorder %s16, 1
    %p97 = por %p95, %p96
    %p98 = scmp.ne.s32.totalorder %s89, %s90
    %p99 = scmp.eq.s32.totalorder %s16, 0
    %p100 = por %p98, %p99
    %p101 = scmp.ne.s32.totalorder %s89, %s90
    %p102 = scmp.eq.s32.totalorder %s17, 1
    %p103 = por %p101, %p102
    %p105 = scmp.ne.s32.totalorder %s90, %s104
    %p106 = scmp.eq.s32.totalorder %s17, 0
    %p107 = por %p105, %p106
    %s109 = sadd.s32 %s108, 1
    %p112 = scmp.eq.s32.totalorder %s11, 1
    %p113 = scmp.ne.s32.totalorder %s108, %s110
    %p114 = scmp.eq.s32.totalorder %s11, 0
    %p115 = por %p113, %p114
    %p116 = scmp.ne.s32.totalorder %s108, %s110
    %p117 = scmp.eq.s32.totalorder %s16, 1
    %p118 = por %p116, %p117
    %p119 = scmp.ne.s32.totalorder %s110, %s111
    %p120 = scmp.eq.s32.totalorder %s16, 0
    %p121 = por %p119, %p120
    %p122 = scmp.ne.s32.totalorder %s110, %s111
    %p123 = scmp.eq.s32.totalorder %s17, 1
    %p124 = por %p122, %p123
    %p126 = scmp.ne.s32.totalorder %s111, %s125
    %p127 = scmp.eq.s32.totalorder %s17, 0
    %p128 = por %p126, %p127
    %s129 = ssub.s32 %s11, %s18
    %p130 = scmp.eq.s32.totalorder %s129, 0
    %s132 = sadd.s32 %s131, 1
    %s133 = scalar_select %p130, %s131, %s132
    %p136 = pneg %p130
    %p137 = scmp.eq.s32.totalorder %s11, 1
    %p138 = por %p136, %p137
    %p139 = scmp.ne.s32.totalorder %s131, %s134
    %p140 = scmp.eq.s32.totalorder %s11, 0
    %p141 = por %p139, %p140
    %p142 = scmp.ne.s32.totalorder %s131, %s134
    %p143 = scmp.eq.s32.totalorder %s16, 1
    %p144 = por %p142, %p143
    %p145 = scmp.ne.s32.totalorder %s134, %s135
    %p146 = scmp.eq.s32.totalorder %s16, 0
    %p147 = por %p145, %p146
    %p148 = scmp.ne.s32.totalorder %s134, %s135
    %p149 = scmp.eq.s32.totalorder %s17, 1
    %p150 = por %p148, %p149
    %p152 = scmp.ne.s32.totalorder %s135, %s151
    %p153 = scmp.eq.s32.totalorder %s17, 0
    %p154 = por %p152, %p153
    %p155 = scmp.le.s32.totalorder 1, %s11
    %p156 = scmp.lt.s32.totalorder %s11, 3
    %p157 = pnand %p155, %p156
    %p158 = pneg %p157
    // Predicated region
    $region9: #{headp_forward.1} parent=5 // pred_check
      _
    $region10: #{headp_forward.1} parent=5 // pred_check_branch
      %160 = sbr.rel (%p157) target = $region12
    $region11: #{headp_forward.1} parent=5 // pred_region
      %s161 = ssub.s32 %s11, 1
      // Predicated region
      $region13: #{headp_forward.1} parent=11 // pred_check
        %p162 = pneg %p58
      $region14: #{headp_forward.1} parent=11 // pred_check_branch
        %164 = sbr.rel (%p162) target = $region16
      $region15: #{headp_forward.1} parent=11 // pred_region
        _
      $region16: #{headp_forward.1} parent=11 // pred_fallthru
        _
      // Predicated region
      $region17: #{headp_forward.1} parent=11 // pred_check
        %p165 = pneg %p79
      $region18: #{headp_forward.1} parent=11 // pred_check_branch
        %167 = sbr.rel (%p165) target = $region20
      $region19: #{headp_forward.1} parent=11 // pred_region
        _
      $region20: #{headp_forward.1} parent=11 // pred_fallthru
        _
      // Predicated region
      $region21: #{headp_forward.1} parent=11 // pred_check
        %p168 = pneg %p100
      $region22: #{headp_forward.1} parent=11 // pred_check_branch
        %170 = sbr.rel (%p168) target = $region24
      $region23: #{headp_forward.1} parent=11 // pred_region
        _
      $region24: #{headp_forward.1} parent=11 // pred_fallthru
        _
      // Predicated region
      $region25: #{headp_forward.1} parent=11 // pred_check
        %p171 = pneg %p121
      $region26: #{headp_forward.1} parent=11 // pred_check_branch
        %173 = sbr.rel (%p171) target = $region28
      $region27: #{headp_forward.1} parent=11 // pred_region
        _
      $region28: #{headp_forward.1} parent=11 // pred_fallthru
        _
    $region12: #{headp_forward.1} parent=5 // pred_fallthru
      _
    %p174 = scmp.lt.s32.totalorder %s11, 2
    // Predicated region
    $region29: #{headp_forward.1} parent=5 // pred_check
      %p175 = pneg %p174
    $region30: #{headp_forward.1} parent=5 // pred_check_branch
      %177 = sbr.rel (%p175) target = $region32
    $region31: #{headp_forward.1} parent=5 // pred_region
      // Predicated region
      $region33: #{headp_forward.1} parent=31 // pred_check
        %p178 = pneg %p31
      $region34: #{headp_forward.1} parent=31 // pred_check_branch
        %180 = sbr.rel (%p178) target = $region36
      $region35: #{headp_forward.1} parent=31 // pred_region
        %p181 = scmp.lt.s32.totalorder %s11, 1
        %s182 = scalar_select %p181, %s11, 1
        %s183 = smul.addr %s182, 3
        %s184 = smul.addr %s183, 8
        %s185 = scalar_lea.vmem %s0, %s184
      $region36: #{headp_forward.1} parent=31 // pred_fallthru
        _
    $region32: #{headp_forward.1} parent=5 // pred_fallthru
      _
    %p186 = scmp.le.s32.totalorder 1, %s11
    %p187 = scmp.lt.s32.totalorder %s11, 3
    %p188 = pnand %p186, %p187
    %p189 = pneg %p188
    // Predicated region
    $region37: #{headp_forward.1} parent=5 // pred_check
      _
    $region38: #{headp_forward.1} parent=5 // pred_check_branch
      %191 = sbr.rel (%p188) target = $region40
    $region39: #{headp_forward.1} parent=5 // pred_region
      %s192 = ssub.s32 %s11, 1
      %p193 = scmp.lt.s32.totalorder %s16, 1
      %s194 = scalar_select %p193, %s16, 1
      %s195 = smul.addr %s194, 3
      %s196 = smul.addr %s195, 8
      %s197 = scalar_lea.vmem %s0, %s196
      %p198 = pneg %p37
      %p199 = pneg %p34
      %p200 = pneg %p58
      %p201 = pneg %p55
      %p202 = pneg %p79
      %p203 = pneg %p76
      %p204 = pneg %p100
      %p205 = pneg %p97
      %p206 = pneg %p121
      %p207 = pneg %p118
      %p208 = pneg %p147
      %p209 = pneg %p144
      %p210 = scmp.lt.s32.totalorder %s16, 1
      %s211 = scalar_select %p210, %s16, 1
      %s212 = smul.addr %s211, 2
      %s213 = smul.addr %s212, 2
      %s214 = scalar_lea.vmem %s5, %s213
      %p215 = scmp.lt.s32.totalorder %s16, 1
      %s216 = scalar_select %p215, %s16, 1
      %s217 = smul.addr %s216, 3
      %s218 = smul.addr %s217, 8
      %s219 = scalar_lea.vmem %s0, %s218
      %p220 = scmp.lt.s32.totalorder %s16, 1
      %s221 = scalar_select %p220, %s16, 1
      %s222 = smul.addr %s221, 2
      %s223 = smul.addr %s222, 2
      %s224 = scalar_lea.vmem %s5, %s223
      %v226 = vld [vmem:[%s219] sm:$0xff]
      %v227 = vld [vmem:[%s219 + $0x8] sm:$0xff]
      %v228 = vld [vmem:[%s219 + $0x10] sm:$0xff]
      %v229 = vlaneseq
      %v230 = vand.u32 %v229, 127
      %v231 = vadd.s32 %v230, 128
      %vm232 = vcmp.lt.s32.totalorder %v230, 0
      %v233 = vsub.s32 0, %v230
      %v234 = vsel %vm232, %v233, %v230
      %v235 = vshrl.u32 %v234, 4
      %v236 = vand.u32 %v234, 15
      %v237 = vsub.s32 0, %v236
      %v238 = vsel %vm232, %v237, %v236
      %vm239 = vcmp.lt.s32.totalorder %v231, 0
      %v240 = vsub.s32 0, %v231
      %v241 = vsel %vm239, %v240, %v231
      %v242 = vshrl.u32 %v241, 4
      %v243 = vand.u32 %v241, 15
      %v244 = vsub.s32 0, %v243
      %v245 = vsel %vm239, %v244, %v243
      %vm246 = vcmp.ne.s32.totalorder %v238, 0
      %vm247 = vcmp.ne.s32.totalorder %v245, 0
      %vm248 = vcmp.lt.s32.totalorder %v238, 0
      %vm249 = vcmp.lt.s32.totalorder %v245, 0
      %vm250 = vmand %vm248, %vm246
      %vm251 = vmand %vm249, %vm247
      %v252 = vadd.s32 %v238, 16
      %v253 = vadd.s32 %v245, 16
      %v254 = vsel %vm250, %v252, %v238
      %v255 = vsel %vm251, %v253, %v245
      %vm256 = vcmp.ge.s32.totalorder %v254, 1
      %vm257 = vcmp.ge.s32.totalorder %v255, 1
      %v258 = vsel %vm256, 1, 0
      %v259 = vsel %vm257, 1, 0
      %vm260 = vcmp.eq.s32.totalorder %v258, 1
      %vm261 = vcmp.eq.s32.totalorder %v259, 1
      %v262 = vsel %vm260, %v226, 0.0
      %v263 = vsel %vm261, %v227, 0.0
      %vm264 = vcmp.lt.s32.totalorder %v254, 15
      %vm265 = vcmp.lt.s32.totalorder %v255, 15
      %v266 = vsel %vm264, 1, 0
      %v267 = vsel %vm265, 1, 0
      %vm268 = vcmp.eq.s32.totalorder %v266, 1
      %vm269 = vcmp.eq.s32.totalorder %v267, 1
      %273 = vrot.lane.b32.xlu0 %v226, 126
      %v274 = vpop.permute.xlu0 %273
      %275 = vrot.lane.b32.xlu0 %v227, 126
      %v276 = vpop.permute.xlu0 %275
      %277 = vrot.lane.b32.xlu0 %v228, 126
      %v278 = vpop.permute.xlu0 %277
      %vm279 = vcmask 1031168
      %v280 = vsel %vm279, %v274, %v276
      %v281 = vsel %vm279, %v276, %v278
      %v284 = vsel %vm268, %v280, 0.0
      %v285 = vsel %vm269, %v281, 0.0
      %286 = vrot.lane.b32.xlu0 %v226, 112
      %v287 = vpop.permute.xlu0 %286
      %288 = vrot.lane.b32.xlu0 %v227, 112
      %v289 = vpop.permute.xlu0 %288
      %290 = vrot.lane.b32.xlu0 %v228, 112
      %v291 = vpop.permute.xlu0 %290
      %vm292 = vcmask 916480
      %v293 = vsel %vm292, %v287, %v289
      %v294 = vsel %vm292, %v289, %v291
      %v297 = vsel %vm260, %v293, 0.0
      %v298 = vsel %vm261, %v294, 0.0
      %299 = vrot.lane.b32.xlu0 %v226, 110
      %v300 = vpop.permute.xlu0 %299
      %301 = vrot.lane.b32.xlu0 %v227, 110
      %v302 = vpop.permute.xlu0 %301
      %303 = vrot.lane.b32.xlu0 %v228, 110
      %v304 = vpop.permute.xlu0 %303
      %vm305 = vcmask 900096
      %v306 = vsel %vm305, %v300, %v302
      %v307 = vsel %vm305, %v302, %v304
      %v310 = vsel %vm268, %v306, 0.0
      %v311 = vsel %vm269, %v307, 0.0
      %312 = vrot.lane.b32.xlu0 %v226, 96
      %v313 = vpop.permute.xlu0 %312
      %314 = vrot.lane.b32.xlu0 %v227, 96
      %v315 = vpop.permute.xlu0 %314
      %316 = vrot.lane.b32.xlu0 %v228, 96
      %v317 = vpop.permute.xlu0 %316
      %vm318 = vcmask 785408
      %v319 = vsel %vm318, %v313, %v315
      %v320 = vsel %vm318, %v315, %v317
      %v323 = vsel %vm260, %v319, 0.0
      %v324 = vsel %vm261, %v320, 0.0
      %325 = vrot.lane.b32.xlu0 %v226, 94
      %v326 = vpop.permute.xlu0 %325
      %327 = vrot.lane.b32.xlu0 %v227, 94
      %v328 = vpop.permute.xlu0 %327
      %329 = vrot.lane.b32.xlu0 %v228, 94
      %v330 = vpop.permute.xlu0 %329
      %vm331 = vcmask 769024
      %v332 = vsel %vm331, %v326, %v328
      %v333 = vsel %vm331, %v328, %v330
      %v336 = vsel %vm268, %v332, 0.0
      %v337 = vsel %vm269, %v333, 0.0
      %338 = vrot.lane.b32.xlu0 %v226, 127
      %v339 = vpop.permute.xlu0 %338
      %340 = vrot.lane.b32.xlu0 %v227, 127
      %v341 = vpop.permute.xlu0 %340
      %342 = vrot.lane.b32.xlu0 %v228, 127
      %v343 = vpop.permute.xlu0 %342
      %vm344 = vcmask 1039360
      %v345 = vsel %vm344, %v339, %v341
      %v346 = vsel %vm344, %v341, %v343
      %349 = vrot.lane.b32.xlu0 %v226, 111
      %v350 = vpop.permute.xlu0 %349
      %351 = vrot.lane.b32.xlu0 %v227, 111
      %v352 = vpop.permute.xlu0 %351
      %353 = vrot.lane.b32.xlu0 %v228, 111
      %v354 = vpop.permute.xlu0 %353
      %vm355 = vcmask 908288
      %v356 = vsel %vm355, %v350, %v352
      %v357 = vsel %vm355, %v352, %v354
      %360 = vrot.lane.b32.xlu0 %v226, 95
      %v361 = vpop.permute.xlu0 %360
      %362 = vrot.lane.b32.xlu0 %v227, 95
      %v363 = vpop.permute.xlu0 %362
      %364 = vrot.lane.b32.xlu0 %v228, 95
      %v365 = vpop.permute.xlu0 %364
      %vm366 = vcmask 777216
      %v367 = vsel %vm366, %v361, %v363
      %v368 = vsel %vm366, %v363, %v365
      %v371 = vpack.c.bf16 %v345, %v262
      %v372 = vpack.c.bf16 %v346, %v263
      %v373 = vpack.c.bf16 %v297, %v284
      %v374 = vpack.c.bf16 %v298, %v285
      %v375 = vpack.c.bf16 %v310, %v356
      %v376 = vpack.c.bf16 %v311, %v357
      %v377 = vpack.c.bf16 %v367, %v323
      %v378 = vpack.c.bf16 %v368, %v324
      %v379 = vpack.c.bf16 %v336, %v336
      %v380 = vpack.c.bf16 %v337, %v337
      %v381 = vld [vmem:[%s1] sm:$0x3]
      %v382 = vld [vmem:[%s2] sm:$0xf]
      %384 = vset.pattern.permute.xlu0 0
      %385 = vperm.xlu0 %384, %v382
      %v386 = vpop.permute.xlu0 %385
      %vm388 = vcmask 588800
      %v390 = vsel %vm388, %v381, 0
      %vm392 = vcmask 1043456
      %v394 = vsel %vm392, %v379, 0
      %v397 = vsel %vm392, %v380, 0
      %399 = vmatprep.subr.bf16.mxu0 0
      %400 = vmatpush1.bf16.msra.mxu0 0
      %401 = vmatprep.subr.bf16.mxu0 0
      %402 = vmatpush1.bf16.msra.mxu0 0
      %403 = vmatprep.subr.bf16.mxu0 0
      %404 = vmatpush1.bf16.msra.mxu0 0
      %405 = vmatprep.subr.bf16.mxu0 %v397
      %406 = vmatpush1.bf16.msra.mxu0 %v394
      %407 = vmatprep.subr.bf16.mxu0 %v378
      %408 = vmatpush1.bf16.msra.mxu0 %v377
      %409 = vmatprep.subr.bf16.mxu0 %v376
      %410 = vmatpush1.bf16.msra.mxu0 %v375
      %411 = vmatprep.subr.bf16.mxu0 %v374
      %412 = vmatpush1.bf16.msra.mxu0 %v373
      %413 = vmatprep.subr.bf16.mxu0 %v372
      %414 = vmatpush1.bf16.msra.mxu0 %v371
      %415 = vmatprep.subr.bf16.mxu0 0
      %416 = vmatpush2.bf16.msra.mxu0 0
      %417 = vmatprep.subr.bf16.mxu0 0
      %418 = vmatpush2.bf16.msra.mxu0 0
      %419 = vmatprep.subr.bf16.mxu0 0
      %420 = vmatpush2.bf16.msra.mxu0 0
      %421 = vmatprep.subr.bf16.mxu0 0
      %422 = vmatpush2.bf16.msra.mxu0 0
      %423 = vmatprep.subr.bf16.mxu0 0
      %424 = vmatpush2.bf16.msra.mxu0 0
      %425 = vmatprep.subr.bf16.mxu0 0
      %426 = vmatpush2.bf16.msra.mxu0 0
      %427 = vmatprep.subr.bf16.mxu0 0
      %428 = vmatpush2.bf16.msra.mxu0 0
      %429 = vmatprep.subr.bf16.mxu0 0
      %430 = vmatpush2.bf16.msra.mxu0 0
      %431 = vmatprep.mubr.bf16.mxu0 0
      %432 = vmatmul.mubr.bf16.gmra.mxu0 %v390
      %v433 = vpop.f32.mrf.mxu0
      %v434 = vadd.f32 %v386, %v433
      %v435 = vpop.f32.mrf.mxu0
      %v436 = vadd.f32 %v386, %v435
      %v437 = vpop.f32.mrf.mxu0
      %v438 = vpop.f32.mrf.mxu0
      %439 = vdwg.mxu0
      %v440 = vmax.f32 %v434, 0.0
      %v441 = vmax.f32 %v436, 0.0
      %v442 = vld [vmem:[%s3] sm:$0x1]
      %v443 = vpack.c.bf16 %v440, %v440
      %v444 = vpack.c.bf16 %v441, %v441
      %v445 = vld [vmem:[%s4] sm:$0x3]
      %447 = vset.pattern.permute.xlu0 0
      %448 = vperm.xlu0 %447, %v445
      %v449 = vpop.permute.xlu0 %448
      %vm451 = vcmask 31744
      %v453 = vsel %vm451, %v442, 0
      %vm455 = vcmask 1041408
      %v457 = vsel %vm455, %v443, 0
      %v460 = vsel %vm455, %v444, 0
      %462 = vmatprep.subr.bf16.mxu0 0
      %463 = vmatpush1.bf16.msra.mxu0 0
      %464 = vmatprep.subr.bf16.mxu0 0
      %465 = vmatpush1.bf16.msra.mxu0 0
      %466 = vmatprep.subr.bf16.mxu0 0
      %467 = vmatpush1.bf16.msra.mxu0 0
      %468 = vmatprep.subr.bf16.mxu0 0
      %469 = vmatpush1.bf16.msra.mxu0 0
      %470 = vmatprep.subr.bf16.mxu0 0
      %471 = vmatpush1.bf16.msra.mxu0 0
      %472 = vmatprep.subr.bf16.mxu0 0
      %473 = vmatpush1.bf16.msra.mxu0 0
      %474 = vmatprep.subr.bf16.mxu0 0
      %475 = vmatpush1.bf16.msra.mxu0 0
      %476 = vmatprep.subr.bf16.mxu0 %v460
      %477 = vmatpush1.bf16.msra.mxu0 %v457
      %478 = vmatprep.subr.bf16.mxu0 0
      %479 = vmatpush2.bf16.msra.mxu0 0
      %480 = vmatprep.subr.bf16.mxu0 0
      %481 = vmatpush2.bf16.msra.mxu0 0
      %482 = vmatprep.subr.bf16.mxu0 0
      %483 = vmatpush2.bf16.msra.mxu0 0
      %484 = vmatprep.subr.bf16.mxu0 0
      %485 = vmatpush2.bf16.msra.mxu0 0
      %486 = vmatprep.subr.bf16.mxu0 0
      %487 = vmatpush2.bf16.msra.mxu0 0
      %488 = vmatprep.subr.bf16.mxu0 0
      %489 = vmatpush2.bf16.msra.mxu0 0
      %490 = vmatprep.subr.bf16.mxu0 0
      %491 = vmatpush2.bf16.msra.mxu0 0
      %492 = vmatprep.subr.bf16.mxu0 0
      %493 = vmatpush2.bf16.msra.mxu0 0
      %494 = vmatprep.mubr.bf16.mxu0 0
      %495 = vmatmul.mubr.bf16.gmra.mxu0 %v453
      %v496 = vpop.f32.mrf.mxu0
      %v497 = vadd.f32 %v449, %v496
      %v498 = vpop.f32.mrf.mxu0
      %v499 = vadd.f32 %v449, %v498
      %v500 = vpop.f32.mrf.mxu0
      %v501 = vpop.f32.mrf.mxu0
      %502 = vdwg.mxu0
      %v505 = vcombine.low %v497, %v499
      %v507 = vunpack.c.l.s4 1983009808
      %v508 = vunpack.c.0.s8 %v507
      %v509 = vlaneseq
      %v510 = vshrl.u32 %v509, 7
      %v511 = vsub.s32 %v508, %v510
      %v512 = vrot.slane %v505, %v511
      %514 = vst [vmem:[%s224] sm:$0xf] %v512
      %p515 = scmp.lt.s32.totalorder %s16, 1
      %s516 = scalar_select %p515, %s16, 1
      %s517 = smul.addr %s516, 2
      %s518 = smul.addr %s517, 2
      %s519 = scalar_lea.vmem %s5, %s518
      // Predicated region
      $region41: #{headp_forward.1} parent=39 // pred_check
        %p520 = pneg %p144
      $region42: #{headp_forward.1} parent=39 // pred_check_branch
        %522 = sbr.rel (%p520) target = $region44
      $region43: #{headp_forward.1} parent=39 // pred_region
        _
      $region44: #{headp_forward.1} parent=39 // pred_fallthru
        _
    $region40: #{headp_forward.1} parent=5 // pred_fallthru
      _
    %p523 = scmp.le.s32.totalorder 2, %s11
    // Predicated region
    $region45: #{headp_forward.1} parent=5 // pred_check
      %p524 = pneg %p523
    $region46: #{headp_forward.1} parent=5 // pred_check_branch
      %526 = sbr.rel (%p524) target = $region48
    $region47: #{headp_forward.1} parent=5 // pred_region
      %s527 = ssub.s32 %s11, 2
      // Predicated region
      $region49: #{headp_forward.1} parent=47 // pred_check
        %p528 = pneg %p150
      $region50: #{headp_forward.1} parent=47 // pred_check_branch
        %530 = sbr.rel (%p528) target = $region52
      $region51: #{headp_forward.1} parent=47 // pred_region
        %p531 = scmp.lt.s32.totalorder %s17, 1
        %s532 = scalar_select %p531, %s17, 1
        %s533 = smul.addr %s532, 2
        %s534 = smul.addr %s533, 2
        %s535 = scalar_lea.vmem %s5, %s534
      $region52: #{headp_forward.1} parent=47 // pred_fallthru
        _
    $region48: #{headp_forward.1} parent=5 // pred_fallthru
      _
  $region6: #{headp_forward.1} parent=0 // loop_footer
    %s15 = sadd.s32 1, %s11
  $region7: #{headp_forward.1} parent=0 // loop_footer_branch
    %10 = sbr.rel target = $region3
  $region8: #{headp_forward.1} parent=0 // loop_exit
    _

</llo_original>
